<compile_context>
chip_gen: v5e
topology: v5e:2x2
jax: 0.10.0
libtpu: 0.0.40
codegen_flags: <defaults>
</compile_context>

<pallas_src>
import jax
import jax.numpy as jnp
from jax.experimental import pallas as pl
from jax.experimental.pallas import tpu as pltpu


def _actor_kernel(x_ref, w1_ref, b1_ref, w2_ref, b2_ref, out_ref):
    # x:   (in_dim, TB)      f32   (cast to bf16 in-kernel)
    # w1:  (hidden, in_dim)  bf16  (resident)    b1: (hidden, 1)  f32
    # w2:  (out_dim, hidden) bf16  (resident)    b2: (out_dim, 1) f32
    # out: (out_dim, TB)     f32   (lane-dense -> unmasked stores)
    x_bf = x_ref[...].astype(jnp.bfloat16)

    # fc + ReLU : (hidden, in_dim) @ (in_dim, TB) -> (hidden, TB), f32 accumulate
    h = jnp.dot(w1_ref[...], x_bf, preferred_element_type=jnp.float32)
    h = jnp.maximum(h + b1_ref[...], 0.0)

    # action_layer : (out_dim, hidden) @ (hidden, TB) -> (out_dim, TB)
    logits = jnp.dot(
        w2_ref[...], h.astype(jnp.bfloat16), preferred_element_type=jnp.float32
    ) + b2_ref[...]

    # numerically-stable softmax over the action axis (sublanes, out_dim=4),
    # exact normalization so probabilities sum to 1 at f32 precision.
    m = jnp.max(logits, axis=0, keepdims=True)
    e = jnp.exp(logits - m)
    denom = jnp.sum(e, axis=0, keepdims=True)
    out_ref[...] = (e / denom).astype(out_ref.dtype)


def actor_forward(state, w1, b1, w2, b2, *, block_b=8192):
    """Actor forward pass as a single batch-tiled Pallas kernel.

    state: (B, input_dim) f32
    w1:    (input_dim, hidden_dim) f32   b1: (hidden_dim,) f32
    w2:    (hidden_dim, output_dim) f32  b2: (output_dim,) f32
    returns action_probs: (B, output_dim) f32
    """
    B, in_dim = state.shape
    hidden_dim = w1.shape[1]
    out_dim = w2.shape[1]

    # Batch tile.  Single grid step with block == full dims when B fits (legal
    # for any B, no padding).  Otherwise lane-aligned tiles (multiple of 128)
    # capped so the grid has >=2 steps: the "parallel" axis then shards across
    # both v7x TensorCores (harmless on v5e/v6e); Pallas masks any ragged tail.
    if B <= block_b:
        tb = B
    else:
        half = ((pl.cdiv(B, 2) + 127) // 128) * 128
        tb = min(block_b, half)
    grid = (pl.cdiv(B, tb),)

    # Layout plumbing only: lane-dense transposed operands.  State stays f32
    # (cast happens in-kernel); tiny weights cast once to bf16.
    x_t = state.T                                    # (in_dim, B)
    w1_t = w1.T.astype(jnp.bfloat16)                 # (hidden, in_dim)
    w2_t = w2.T.astype(jnp.bfloat16)                 # (out_dim, hidden)
    b1_c = b1.reshape(hidden_dim, 1).astype(jnp.float32)
    b2_c = b2.reshape(out_dim, 1).astype(jnp.float32)

    out_t = pl.pallas_call(
        _actor_kernel,
        out_shape=jax.ShapeDtypeStruct((out_dim, B), jnp.float32),
        grid_spec=pltpu.PrefetchScalarGridSpec(
            num_scalar_prefetch=0,
            grid=grid,
            in_specs=[
                pl.BlockSpec((in_dim, tb), lambda i: (0, i)),           # state tile
                pl.BlockSpec((hidden_dim, in_dim), lambda i: (0, 0)),   # w1^T resident
                pl.BlockSpec((hidden_dim, 1), lambda i: (0, 0)),        # b1 resident
                pl.BlockSpec((out_dim, hidden_dim), lambda i: (0, 0)),  # w2^T resident
                pl.BlockSpec((out_dim, 1), lambda i: (0, 0)),           # b2 resident
            ],
            out_specs=pl.BlockSpec((out_dim, tb), lambda i: (0, i)),
        ),
        compiler_params=pltpu.CompilerParams(
            dimension_semantics=("parallel",),      # megacore sharding on v7x
            vmem_limit_bytes=32 * 1024 * 1024,
        ),
    )(x_t, w1_t, b1_c, w2_t, b2_c)

    return out_t.T  # (B, out_dim)


def init_actor_params(key, input_dim=8, hidden_dim=128, output_dim=4):
    """Deterministic init mimicking PyTorch nn.Linear default
    (U[-1/sqrt(fan_in), 1/sqrt(fan_in)])."""
    k1, k2, k3, k4 = jax.random.split(key, 4)
    bound1 = 1.0 / jnp.sqrt(jnp.float32(input_dim))
    bound2 = 1.0 / jnp.sqrt(jnp.float32(hidden_dim))
    w1 = jax.random.uniform(k1, (input_dim, hidden_dim), jnp.float32, -bound1, bound1)
    b1 = jax.random.uniform(k2, (hidden_dim,), jnp.float32, -bound1, bound1)
    w2 = jax.random.uniform(k3, (hidden_dim, output_dim), jnp.float32, -bound2, bound2)
    b2 = jax.random.uniform(k4, (output_dim,), jnp.float32, -bound2, bound2)
    return w1, b1, w2, b2


def _reference_bf16(state, w1, b1, w2, b2):
    """Plain-JAX reference matching the kernel's bf16-operand / f32-accumulate math."""
    h = jnp.maximum(
        jnp.dot(state.astype(jnp.bfloat16), w1.astype(jnp.bfloat16),
                preferred_element_type=jnp.float32) + b1, 0.0)
    logits = jnp.dot(h.astype(jnp.bfloat16), w2.astype(jnp.bfloat16),
                     preferred_element_type=jnp.float32) + b2
    return jax.nn.softmax(logits, axis=-1)


def _reference_f32(state, w1, b1, w2, b2):
    h = jnp.maximum(state @ w1 + b1, 0.0)
    return jax.nn.softmax(h @ w2 + b2, axis=-1)


if __name__ == "__main__":
    key = jax.random.PRNGKey(0)
    pkey, xkey, xkey2 = jax.random.split(key, 3)

    input_dim, hidden_dim, output_dim = 8, 128, 4
    batch = 2  # small demo batch

    w1, b1, w2, b2 = init_actor_params(pkey, input_dim, hidden_dim, output_dim)
    state = jax.random.normal(xkey, (batch, input_dim), jnp.float32)

    probs = actor_forward(state, w1, b1, w2, b2)
    probs = jax.block_until_ready(probs)
    assert probs.shape == (batch, output_dim)

    # reference 1: bf16-matched math (tight tolerance)
    ref_bf = _reference_bf16(state, w1, b1, w2, b2)
    assert jnp.allclose(probs, ref_bf, atol=2e-3), "mismatch vs bf16-matched reference"

    # reference 2: full f32 PyTorch-equivalent forward (covers bf16 cast error)
    ref_f32 = _reference_f32(state, w1, b1, w2, b2)
    assert jnp.allclose(probs, ref_f32, atol=2e-2), "mismatch vs f32 reference"

    # probabilities sum to 1 (exact divide -> f32-precision normalization)
    assert jnp.allclose(jnp.sum(probs, axis=-1), 1.0, atol=1e-5)

    # second check: multi-step grid path (3 tiles of 128) so the batch pipeline
    # / resident-weight index maps are exercised, not just the single-step case.
    big_batch = 384
    state2 = jax.random.normal(xkey2, (big_batch, input_dim), jnp.float32)
    probs2 = jax.block_until_ready(
        actor_forward(state2, w1, b1, w2, b2, block_b=128)
    )
    assert probs2.shape == (big_batch, output_dim)
    assert jnp.allclose(probs2, _reference_bf16(state2, w1, b1, w2, b2), atol=2e-3)
    assert jnp.allclose(jnp.sum(probs2, axis=-1), 1.0, atol=1e-5)

    print("KERNEL_OK")
</pallas_src>

<mosaic_0001>
module attributes {stable_mosaic.version = 11 : i64} {
  func.func @_actor_kernel(%arg0: i32, %arg1: memref<8x2xf32, #tpu.memory_space<vmem>>, %arg2: memref<128x8xbf16, #tpu.memory_space<vmem>>, %arg3: memref<128x1xf32, #tpu.memory_space<vmem>>, %arg4: memref<4x128xbf16, #tpu.memory_space<vmem>>, %arg5: memref<4x1xf32, #tpu.memory_space<vmem>>, %arg6: memref<4x2xf32, #tpu.memory_space<vmem>>) attributes {dimension_semantics = [#tpu.dimension_semantics<parallel>], iteration_bounds = array<i64: 1>, scalar_prefetch = 0 : i64, scratch_operands = 0 : i64, tpu.core_type = #tpu.core_type<tc>, window_params = [{transform_indices = @transform_0, window_bounds = array<i64: 8, 2>}, {pipeline_mode = #tpu.pipeline_mode<synchronous>, transform_indices = @transform_1, window_bounds = array<i64: 128, 8>}, {pipeline_mode = #tpu.pipeline_mode<synchronous>, transform_indices = @transform_2, window_bounds = array<i64: 128, 1>}, {pipeline_mode = #tpu.pipeline_mode<synchronous>, transform_indices = @transform_3, window_bounds = array<i64: 4, 128>}, {pipeline_mode = #tpu.pipeline_mode<synchronous>, transform_indices = @transform_4, window_bounds = array<i64: 4, 1>}, {transform_indices = @transform_5, window_bounds = array<i64: 4, 2>}]} {
    %c0 = arith.constant 0 : index
    %c0_0 = arith.constant 0 : index
    %0 = vector.load %arg1[%c0, %c0_0] : memref<8x2xf32, #tpu.memory_space<vmem>>, vector<8x2xf32>
    %1 = arith.truncf %0 : vector<8x2xf32> to vector<8x2xbf16>
    %c0_1 = arith.constant 0 : index
    %c0_2 = arith.constant 0 : index
    %2 = vector.load %arg2[%c0_1, %c0_2] : memref<128x8xbf16, #tpu.memory_space<vmem>>, vector<128x8xbf16>
    %cst = arith.constant dense<0.000000e+00> : vector<128x2xf32>
    %3 = tpu.matmul %2, %1, %cst {dimension_numbers = #tpu.dot_dimension_numbers<[1], [0], [0], [1], [0, 0, 1, 1], [], []>} : vector<128x8xbf16>, vector<8x2xbf16>, vector<128x2xf32> -> vector<128x2xf32>
    %c0_3 = arith.constant 0 : index
    %c0_4 = arith.constant 0 : index
    %4 = vector.load %arg3[%c0_3, %c0_4] : memref<128x1xf32, #tpu.memory_space<vmem>>, vector<128x1xf32>
    %5 = vector.broadcast %4 : vector<128x1xf32> to vector<128x2xf32>
    %6 = arith.addf %3, %5 : vector<128x2xf32>
    %cst_5 = arith.constant 0.000000e+00 : f32
    %7 = vector.broadcast %cst_5 : f32 to vector<128x2xf32>
    %8 = arith.maximumf %6, %7 : vector<128x2xf32>
    %c0_6 = arith.constant 0 : index
    %c0_7 = arith.constant 0 : index
    %9 = vector.load %arg4[%c0_6, %c0_7] : memref<4x128xbf16, #tpu.memory_space<vmem>>, vector<4x128xbf16>
    %10 = arith.truncf %8 : vector<128x2xf32> to vector<128x2xbf16>
    %cst_8 = arith.constant dense<0.000000e+00> : vector<4x2xf32>
    %11 = tpu.matmul %9, %10, %cst_8 {dimension_numbers = #tpu.dot_dimension_numbers<[1], [0], [0], [1], [0, 0, 1, 1], [], []>} : vector<4x128xbf16>, vector<128x2xbf16>, vector<4x2xf32> -> vector<4x2xf32>
    %c0_9 = arith.constant 0 : index
    %c0_10 = arith.constant 0 : index
    %12 = vector.load %arg5[%c0_9, %c0_10] : memref<4x1xf32, #tpu.memory_space<vmem>>, vector<4x1xf32>
    %13 = vector.broadcast %12 : vector<4x1xf32> to vector<4x2xf32>
    %14 = arith.addf %11, %13 : vector<4x2xf32>
    %cst_11 = arith.constant dense<0xFF800000> : vector<2xf32>
    %15 = vector.multi_reduction <maximumf>, %14, %cst_11 [0] : vector<4x2xf32> to vector<2xf32>
    %16 = vector.shape_cast %15 : vector<2xf32> to vector<1x2xf32>
    %17 = vector.broadcast %16 : vector<1x2xf32> to vector<4x2xf32>
    %18 = arith.subf %14, %17 : vector<4x2xf32>
    %19 = math.exp %18 : vector<4x2xf32>
    %cst_12 = arith.constant dense<0.000000e+00> : vector<2xf32>
    %20 = vector.multi_reduction <add>, %19, %cst_12 [0] : vector<4x2xf32> to vector<2xf32>
    %21 = vector.shape_cast %20 : vector<2xf32> to vector<1x2xf32>
    %22 = vector.broadcast %21 : vector<1x2xf32> to vector<4x2xf32>
    %23 = arith.divf %19, %22 : vector<4x2xf32>
    %c0_13 = arith.constant 0 : index
    %c0_14 = arith.constant 0 : index
    %24 = vector.load %arg6[%c0_13, %c0_14] : memref<4x2xf32, #tpu.memory_space<vmem>>, vector<4x2xf32>
    tpu.vector_store %arg6[%c0_13, %c0_14], %23 {strides = array<i32>} : memref<4x2xf32, #tpu.memory_space<vmem>>, vector<4x2xf32>,
    return
  }
  func.func @transform_0(%arg0: i32) -> (i32, i32) {
    %c0_i32 = arith.constant 0 : i32
    %c0_i32_0 = arith.constant 0 : i32
    return %c0_i32, %arg0 : i32, i32
  }
  func.func @transform_1(%arg0: i32) -> (i32, i32) {
    %c0_i32 = arith.constant 0 : i32
    %c0_i32_0 = arith.constant 0 : i32
    %c0_i32_1 = arith.constant 0 : i32
    return %c0_i32, %c0_i32_0 : i32, i32
  }
  func.func @transform_2(%arg0: i32) -> (i32, i32) {
    %c0_i32 = arith.constant 0 : i32
    %c0_i32_0 = arith.constant 0 : i32
    %c0_i32_1 = arith.constant 0 : i32
    return %c0_i32, %c0_i32_0 : i32, i32
  }
  func.func @transform_3(%arg0: i32) -> (i32, i32) {
    %c0_i32 = arith.constant 0 : i32
    %c0_i32_0 = arith.constant 0 : i32
    %c0_i32_1 = arith.constant 0 : i32
    return %c0_i32, %c0_i32_0 : i32, i32
  }
  func.func @transform_4(%arg0: i32) -> (i32, i32) {
    %c0_i32 = arith.constant 0 : i32
    %c0_i32_0 = arith.constant 0 : i32
    %c0_i32_1 = arith.constant 0 : i32
    return %c0_i32, %c0_i32_0 : i32, i32
  }
  func.func @transform_5(%arg0: i32) -> (i32, i32) {
    %c0_i32 = arith.constant 0 : i32
    %c0_i32_0 = arith.constant 0 : i32
    return %c0_i32, %arg0 : i32, i32
  }
}

</mosaic_0001>

<llo_original>
// kernel: tpu_custom_call.1
$region0: #{tpu_custom_call.1}
  #allocation0 [shape = 'u32[]', space=smem, size = 0x4, offset = 0x4, fixed_abs, tag = 'smem constant byte address 0x4 - core index']
  #allocation1 [shape = 'u32[72,128]{1,0:T(1,128)}', space=vmem, size = 0x9000, scoped, tag = 'internal scratch']
  %s0 = inlined_call_operand.vmem [shape: f32[8,2], index: 0, kind: input, shape index: {}]
  %s1 = inlined_call_operand.vmem [shape: bf16[128,8], index: 1, kind: input, shape index: {}]
  %s2 = inlined_call_operand.vmem [shape: f32[128,1], index: 2, kind: input, shape index: {}]
  %s3 = inlined_call_operand.vmem [shape: bf16[4,128], index: 3, kind: input, shape index: {}]
  %s4 = inlined_call_operand.vmem [shape: f32[4,1], index: 4, kind: input, shape index: {}]
  %s5 = inlined_call_operand.vmem [shape: f32[4,2], index: 5, kind: output, shape index: {}]
  %s6 = sld [smem:[#allocation0]]
  $region30: #{tpu_custom_call.1} parent=0
    _
  %s8 = ssub.s32 1, %s6
  %s9 = scalar_select 0, %s8, %s6
  // Predicated region
  $region2: #{tpu_custom_call.1} parent=0 // pred_check
    _
  $region3: #{tpu_custom_call.1} parent=0 // pred_check_branch
    %11 = sbr.rel (0) target = $region5
  $region4: #{tpu_custom_call.1} parent=0 // pred_region
    _
  $region5: #{tpu_custom_call.1} parent=0 // pred_fallthru
    _
  // Predicated region
  $region6: #{tpu_custom_call.1} parent=0 // pred_check
    _
  $region7: #{tpu_custom_call.1} parent=0 // pred_check_branch
    %13 = sbr.rel (0) target = $region9
  $region8: #{tpu_custom_call.1} parent=0 // pred_region
    _
  $region9: #{tpu_custom_call.1} parent=0 // pred_fallthru
    _
  // Predicated region
  $region10: #{tpu_custom_call.1} parent=0 // pred_check
    _
  $region11: #{tpu_custom_call.1} parent=0 // pred_check_branch
    %15 = sbr.rel (0) target = $region13
  $region12: #{tpu_custom_call.1} parent=0 // pred_region
    _
  $region13: #{tpu_custom_call.1} parent=0 // pred_fallthru
    _
  // Predicated region
  $region14: #{tpu_custom_call.1} parent=0 // pred_check
    _
  $region15: #{tpu_custom_call.1} parent=0 // pred_check_branch
    %17 = sbr.rel (0) target = $region17
  $region16: #{tpu_custom_call.1} parent=0 // pred_region
    _
  $region17: #{tpu_custom_call.1} parent=0 // pred_fallthru
    _
  // Predicated region
  $region18: #{tpu_custom_call.1} parent=0 // pred_check
    _
  $region19: #{tpu_custom_call.1} parent=0 // pred_check_branch
    %19 = sbr.rel (0) target = $region21
  $region20: #{tpu_custom_call.1} parent=0 // pred_region
    _
  $region21: #{tpu_custom_call.1} parent=0 // pred_fallthru
    _
  %v21 = vld [vmem:[%s0] sm:$0xff]
  %v22 = vpack.c.bf16 %v21, %v21
  %v23 = vld [vmem:[%s1] sm:$0xf]
  %v24 = vld [vmem:[%s1 + $0x4] sm:$0xf]
  %v25 = vld [vmem:[%s1 + $0x8] sm:$0xf]
  %v26 = vld [vmem:[%s1 + $0xc] sm:$0xf]
  %v27 = vld [vmem:[%s1 + $0x10] sm:$0xf]
  %v28 = vld [vmem:[%s1 + $0x14] sm:$0xf]
  %v29 = vld [vmem:[%s1 + $0x18] sm:$0xf]
  %v30 = vld [vmem:[%s1 + $0x1c] sm:$0xf]
  %v31 = vld [vmem:[%s1 + $0x20] sm:$0xf]
  %v32 = vld [vmem:[%s1 + $0x24] sm:$0xf]
  %v33 = vld [vmem:[%s1 + $0x28] sm:$0xf]
  %v34 = vld [vmem:[%s1 + $0x2c] sm:$0xf]
  %v35 = vld [vmem:[%s1 + $0x30] sm:$0xf]
  %v36 = vld [vmem:[%s1 + $0x34] sm:$0xf]
  %v37 = vld [vmem:[%s1 + $0x38] sm:$0xf]
  %v38 = vld [vmem:[%s1 + $0x3c] sm:$0xf]
  %v39 = vld [vmem:[%s2] sm:$0xff]
  %v40 = vld [vmem:[%s2 + $0x8] sm:$0xff]
  %v41 = vld [vmem:[%s2 + $0x10] sm:$0xff]
  %v42 = vld [vmem:[%s2 + $0x18] sm:$0xff]
  %v43 = vld [vmem:[%s2 + $0x20] sm:$0xff]
  %v44 = vld [vmem:[%s2 + $0x28] sm:$0xff]
  %v45 = vld [vmem:[%s2 + $0x30] sm:$0xff]
  %v46 = vld [vmem:[%s2 + $0x38] sm:$0xff]
  %v47 = vld [vmem:[%s2 + $0x40] sm:$0xff]
  %v48 = vld [vmem:[%s2 + $0x48] sm:$0xff]
  %v49 = vld [vmem:[%s2 + $0x50] sm:$0xff]
  %v50 = vld [vmem:[%s2 + $0x58] sm:$0xff]
  %v51 = vld [vmem:[%s2 + $0x60] sm:$0xff]
  %v52 = vld [vmem:[%s2 + $0x68] sm:$0xff]
  %v53 = vld [vmem:[%s2 + $0x70] sm:$0xff]
  %v54 = vld [vmem:[%s2 + $0x78] sm:$0xff]
  %56 = vset.pattern.permute.xlu0 0
  %57 = vperm.xlu0 %56, %v39
  %v58 = vpop.permute.xlu0 %57
  %61 = vset.pattern.permute.xlu0 0
  %62 = vperm.xlu0 %61, %v40
  %v63 = vpop.permute.xlu0 %62
  %66 = vset.pattern.permute.xlu0 0
  %67 = vperm.xlu0 %66, %v41
  %v68 = vpop.permute.xlu0 %67
  %71 = vset.pattern.permute.xlu0 0
  %72 = vperm.xlu0 %71, %v42
  %v73 = vpop.permute.xlu0 %72
  %76 = vset.pattern.permute.xlu0 0
  %77 = vperm.xlu0 %76, %v43
  %v78 = vpop.permute.xlu0 %77
  %81 = vset.pattern.permute.xlu0 0
  %82 = vperm.xlu0 %81, %v44
  %v83 = vpop.permute.xlu0 %82
  %86 = vset.pattern.permute.xlu0 0
  %87 = vperm.xlu0 %86, %v45
  %v88 = vpop.permute.xlu0 %87
  %91 = vset.pattern.permute.xlu0 0
  %92 = vperm.xlu0 %91, %v46
  %v93 = vpop.permute.xlu0 %92
  %96 = vset.pattern.permute.xlu0 0
  %97 = vperm.xlu0 %96, %v47
  %v98 = vpop.permute.xlu0 %97
  %101 = vset.pattern.permute.xlu0 0
  %102 = vperm.xlu0 %101, %v48
  %v103 = vpop.permute.xlu0 %102
  %106 = vset.pattern.permute.xlu0 0
  %107 = vperm.xlu0 %106, %v49
  %v108 = vpop.permute.xlu0 %107
  %111 = vset.pattern.permute.xlu0 0
  %112 = vperm.xlu0 %111, %v50
  %v113 = vpop.permute.xlu0 %112
  %116 = vset.pattern.permute.xlu0 0
  %117 = vperm.xlu0 %116, %v51
  %v118 = vpop.permute.xlu0 %117
  %121 = vset.pattern.permute.xlu0 0
  %122 = vperm.xlu0 %121, %v52
  %v123 = vpop.permute.xlu0 %122
  %126 = vset.pattern.permute.xlu0 0
  %127 = vperm.xlu0 %126, %v53
  %v128 = vpop.permute.xlu0 %127
  %131 = vset.pattern.permute.xlu0 0
  %132 = vperm.xlu0 %131, %v54
  %v133 = vpop.permute.xlu0 %132
  %v151 = vunpack.c.l.b16 %v23
  %v152 = vunpack.c.l.b16 %v24
  %v153 = vunpack.c.l.b16 %v25
  %v154 = vunpack.c.l.b16 %v26
  %v155 = vunpack.c.l.b16 %v27
  %v156 = vunpack.c.l.b16 %v28
  %v157 = vunpack.c.l.b16 %v29
  %v158 = vunpack.c.l.b16 %v30
  %v159 = vunpack.c.l.b16 %v31
  %v160 = vunpack.c.l.b16 %v32
  %v161 = vunpack.c.l.b16 %v33
  %v162 = vunpack.c.l.b16 %v34
  %v163 = vunpack.c.l.b16 %v35
  %v164 = vunpack.c.l.b16 %v36
  %v165 = vunpack.c.l.b16 %v37
  %v166 = vunpack.c.l.b16 %v38
  %v167 = vpack.c.b16 %v152, %v151
  %v168 = vpack.c.b16 %v154, %v153
  %v169 = vpack.c.b16 %v156, %v155
  %v170 = vpack.c.b16 %v158, %v157
  %v171 = vpack.c.b16 %v160, %v159
  %v172 = vpack.c.b16 %v162, %v161
  %v173 = vpack.c.b16 %v164, %v163
  %v174 = vpack.c.b16 %v166, %v165
  %vm175 = vcmask 64512
  %v177 = vsel %vm175, %v167, 0
  %v180 = vsel %vm175, %v168, 0
  %v183 = vsel %vm175, %v169, 0
  %v186 = vsel %vm175, %v170, 0
  %v189 = vsel %vm175, %v171, 0
  %v192 = vsel %vm175, %v172, 0
  %v195 = vsel %vm175, %v173, 0
  %v198 = vsel %vm175, %v174, 0
  %vm200 = vcmask 1043456
  %v202 = vsel %vm200, %v22, 0
  %204 = vmatpush.bf16.msra.mxu0 0
  %205 = vmatpush.bf16.msra.mxu0 0
  %206 = vmatpush.bf16.msra.mxu0 0
  %207 = vmatpush.bf16.msra.mxu0 0
  %208 = vmatpush.bf16.msra.mxu0 0
  %209 = vmatpush.bf16.msra.mxu0 0
  %210 = vmatpush.bf16.msra.mxu0 0
  %211 = vmatpush.bf16.msra.mxu0 %v202
  %212 = vmatmul.bf16.gmra.mxu0 %v177
  %v213 = vpop.f32.mrf.mxu0
  %v214 = vadd.f32 %v58, %v213
  %v215 = vpop.f32.mrf.mxu0
  %v216 = vadd.f32 %v63, %v215
  %217 = vmatmul.bf16.gmra.mxu0 %v180
  %v218 = vpop.f32.mrf.mxu0
  %v219 = vadd.f32 %v68, %v218
  %v220 = vpop.f32.mrf.mxu0
  %v221 = vadd.f32 %v73, %v220
  %222 = vmatmul.bf16.gmra.mxu0 %v183
  %v223 = vpop.f32.mrf.mxu0
  %v224 = vadd.f32 %v78, %v223
  %v225 = vpop.f32.mrf.mxu0
  %v226 = vadd.f32 %v83, %v225
  %227 = vmatmul.bf16.gmra.mxu0 %v186
  %v228 = vpop.f32.mrf.mxu0
  %v229 = vadd.f32 %v88, %v228
  %v230 = vpop.f32.mrf.mxu0
  %v231 = vadd.f32 %v93, %v230
  %232 = vmatmul.bf16.gmra.mxu0 %v189
  %v233 = vpop.f32.mrf.mxu0
  %v234 = vadd.f32 %v98, %v233
  %v235 = vpop.f32.mrf.mxu0
  %v236 = vadd.f32 %v103, %v235
  %237 = vmatmul.bf16.gmra.mxu0 %v192
  %v238 = vpop.f32.mrf.mxu0
  %v239 = vadd.f32 %v108, %v238
  %v240 = vpop.f32.mrf.mxu0
  %v241 = vadd.f32 %v113, %v240
  %242 = vmatmul.bf16.gmra.mxu0 %v195
  %v243 = vpop.f32.mrf.mxu0
  %v244 = vadd.f32 %v118, %v243
  %v245 = vpop.f32.mrf.mxu0
  %v246 = vadd.f32 %v123, %v245
  %247 = vmatmul.bf16.gmra.mxu0 %v198
  %v248 = vpop.f32.mrf.mxu0
  %v249 = vadd.f32 %v128, %v248
  %v250 = vpop.f32.mrf.mxu0
  %v251 = vadd.f32 %v133, %v250
  %252 = vdwg.mxu0
  %v253 = vmax.f32 %v214, 0.0
  %v254 = vmax.f32 %v216, 0.0
  %v255 = vmax.f32 %v219, 0.0
  %v256 = vmax.f32 %v221, 0.0
  %v257 = vmax.f32 %v224, 0.0
  %v258 = vmax.f32 %v226, 0.0
  %v259 = vmax.f32 %v229, 0.0
  %v260 = vmax.f32 %v231, 0.0
  %v261 = vmax.f32 %v234, 0.0
  %v262 = vmax.f32 %v236, 0.0
  %v263 = vmax.f32 %v239, 0.0
  %v264 = vmax.f32 %v241, 0.0
  %v265 = vmax.f32 %v244, 0.0
  %v266 = vmax.f32 %v246, 0.0
  %v267 = vmax.f32 %v249, 0.0
  %v268 = vmax.f32 %v251, 0.0
  %v269 = vld [vmem:[%s3] sm:$0x3]
  %v270 = vpack.c.bf16 %v254, %v253
  %v271 = vpack.c.bf16 %v256, %v255
  %v272 = vpack.c.bf16 %v258, %v257
  %v273 = vpack.c.bf16 %v260, %v259
  %v274 = vpack.c.bf16 %v262, %v261
  %v275 = vpack.c.bf16 %v264, %v263
  %v276 = vpack.c.bf16 %v266, %v265
  %v277 = vpack.c.bf16 %v268, %v267
  %v278 = vld [vmem:[%s4] sm:$0xf]
  %280 = vset.pattern.permute.xlu0 0
  %281 = vperm.xlu0 %280, %v278
  %v282 = vpop.permute.xlu0 %281
  %284 = vmatpush.bf16.msra.mxu0 %v277
  %285 = vmatpush.bf16.msra.mxu0 %v276
  %286 = vmatpush.bf16.msra.mxu0 %v275
  %287 = vmatpush.bf16.msra.mxu0 %v274
  %288 = vmatpush.bf16.msra.mxu0 %v273
  %289 = vmatpush.bf16.msra.mxu0 %v272
  %290 = vmatpush.bf16.msra.mxu0 %v271
  %291 = vmatpush.bf16.msra.mxu0 %v270
  %292 = vmatmul.bf16.gmra.mxu0 %v269
  %v293 = vpop.f32.mrf.mxu0
  %v294 = vadd.f32 %v282, %v293
  %v295 = vpop.f32.mrf.mxu0
  %296 = vdwg.mxu0
  %vm297 = vcmask 11264
  %v298 = vsel %vm297, %v294, -inf
  %v299 = vrot.slane %v298, 4
  %v300 = vmax.f32 %v298, %v299
  %v301 = vrot.slane %v300, 2
  %v302 = vmax.f32 %v300, %v301
  %v303 = vrot.slane %v302, 1
  %v304 = vmax.f32 %v302, %v303
  %v305 = vsub.f32 %v294, %v304
  %v306 = vmul.f32 %v305, 1.442695
  %v307 = vpow.pop %v306
  %v308 = vsel %vm297, %v307, 0.0
  %v309 = vrot.slane %v308, 4
  %v310 = vadd.f32 %v308, %v309
  %v311 = vrot.slane %v310, 2
  %v312 = vadd.f32 %v310, %v311
  %v313 = vrot.slane %v312, 1
  %v314 = vadd.f32 %v312, %v313
  %v315 = vrcp.pop %v314
  %v316 = vmul.f32 %v314, %v315
  %v317 = vsub.f32 1.0, %v316
  %v318 = vmul.f32 %v315, %v317
  %v319 = vadd.f32 %v315, %v318
  %vm320 = vweird.f32 %v314
  %vm321 = vweird.f32 %v315
  %vm322 = vmor %vm320, %vm321
  %v323 = vsel %vm322, %v315, %v319
  %v324 = vand.u32 2147483647, %v314
  %vm325 = vcmp.eq.f32.partialorder %v324, 8.507059e+37
  %v326 = vand.u32 %v314, 2147483648
  %v327 = vor.u32 1.1754944e-38, %v326
  %v328 = vsel %vm325, %v327, %v323
  %v329 = vmul.f32 %v307, %v328
  %330 = vst.msk [vmem:[%s5] sm:$0xf] %vm297, %v329
  // Predicated region
  $region22: #{tpu_custom_call.1} parent=0 // pred_check
    _
  $region23: #{tpu_custom_call.1} parent=0 // pred_check_branch
    %332 = sbr.rel (0) target = $region25
  $region24: #{tpu_custom_call.1} parent=0 // pred_region
    _
  $region25: #{tpu_custom_call.1} parent=0 // pred_fallthru
    _
  // Predicated region
  $region26: #{tpu_custom_call.1} parent=0 // pred_check
    _
  $region27: #{tpu_custom_call.1} parent=0 // pred_check_branch
    %334 = sbr.rel (0) target = $region29
  $region28: #{tpu_custom_call.1} parent=0 // pred_region
    _
  $region29: #{tpu_custom_call.1} parent=0 // pred_fallthru
    _

</llo_original>
